<compile_context>
chip_gen: v7x
topology: tpu7x:2x2x1
jax: 0.10.0
libtpu: 0.0.40
codegen_flags: <defaults>
</compile_context>

<pallas_src>
from functools import partial

import jax
import jax.numpy as jnp
from jax.experimental import pallas as pl
from jax.experimental.pallas import tpu as pltpu


def _attn_weights_kernel(x_ref, w_rows_ref, sel_ref, b_ref, o_ref,
                         sum_ref, sq_ref, *, eps, inv_hw, inv_hw_m1):
    # x_ref:      (row_tile, hw_tile)   streamed activation block
    # w_rows_ref: (row_tile, K)         BN-folded conv weight, repeated per batch-row
    # sel_ref:    (b_tile, row_tile)    0/1 matrix summing the C rows of each batch
    # b_ref:      (1, K)                BN-folded bias
    # o_ref:      (b_tile, K)           output block (written on last HW step)
    # sum_ref/sq_ref: (row_tile, 1)     f32 accumulators (VMEM scratch)
    j = pl.program_id(1)

    @pl.when(j == 0)
    def _init():
        sum_ref[...] = jnp.zeros_like(sum_ref)
        sq_ref[...] = jnp.zeros_like(sq_ref)

    x = x_ref[...].astype(jnp.float32)
    sum_ref[...] += jnp.sum(x, axis=-1, keepdims=True)
    sq_ref[...] += jnp.sum(x * x, axis=-1, keepdims=True)

    @pl.when(j == pl.num_programs(1) - 1)
    def _finalize():
        s = sum_ref[...]                                      # (row_tile, 1)
        mean = s * inv_hw
        # unbiased variance: (sumsq - hw*mean^2) / (hw - 1); clamp cancellation
        var = jnp.maximum(sq_ref[...] - s * mean, 0.0) * inv_hw_m1
        y = mean * jax.lax.rsqrt(var + eps)                   # (row_tile, 1)

        # 1x1 conv (BN folded): z[b, k] = sum_c y[b, c] * w_eff[c, k] + b_eff[k]
        # done as (y * w_rows) summed per batch with a tiny 0/1 matmul -> no
        # in-kernel reshape of the flattened (B*C) row layout is needed.
        contrib = y * w_rows_ref[...]                         # (row_tile, K)
        z = jnp.dot(sel_ref[...], contrib,
                    preferred_element_type=jnp.float32) + b_ref[...]

        # HSigmoidv2: relu6(z + 3) / 6
        o_ref[...] = (jnp.clip(z + 3.0, 0.0, 6.0) * (1.0 / 6.0)).astype(o_ref.dtype)


def _round_up(x, m):
    return (x + m - 1) // m * m


def attn_weights_forward(x, w_t, gamma, beta, run_mean, run_var,
                         *, eps=1e-3, bn_eps=1e-5,
                         hw_tile=512, target_rows=256):
    """AttnWeights forward. x: (B, C, H, W) f32/bf16; w_t: (C, K); BN params (K,).
    Returns (B, K) float32."""
    B, C, H, W = x.shape
    K = w_t.shape[1]
    hw = H * W
    f32 = jnp.float32

    gamma = jnp.asarray(gamma).reshape(-1).astype(f32)
    beta = jnp.asarray(beta).reshape(-1).astype(f32)
    run_mean = jnp.asarray(run_mean).reshape(-1).astype(f32)
    run_var = jnp.asarray(run_var).reshape(-1).astype(f32)

    # Fold eval-mode BatchNorm2d into the 1x1-conv weight / bias.
    scale = gamma * jax.lax.rsqrt(run_var + bn_eps)           # (K,)
    w_eff = w_t.astype(f32) * scale[None, :]                  # (C, K)
    b_eff = (beta - run_mean * scale).reshape(1, K)           # (1, K)

    # ---- tiling choices ------------------------------------------------------
    hw_tile = max(128, (int(hw_tile) // 128) * 128)           # lane-aligned
    hw_tile = min(hw_tile, _round_up(hw, 128))

    if B * C <= target_rows:
        b_tile = B                                            # one full-extent row tile
    else:
        b_tile = max(8, ((target_rows // max(C, 1)) // 8) * 8)  # multiple of 8
    row_tile = b_tile * C

    # keep the streamed x block modest so 2-deep pipelining fits v7x's 64 MiB VMEM
    while row_tile * hw_tile * 4 > (4 << 20) and hw_tile > 128:
        hw_tile //= 2

    B_pad = _round_up(B, b_tile)
    HW_pad = _round_up(hw, hw_tile)
    rows = B * C
    rows_pad = B_pad * C

    # ---- lay out x as (B*C, HW); zero-pad rows / lanes (exact for sum/sumsq) --
    xf = x.reshape(rows, hw)
    if rows_pad != rows or HW_pad != hw:
        xf = jnp.pad(xf, ((0, rows_pad - rows), (0, HW_pad - hw)))

    # per-row copy of the folded weight + 0/1 batch-sum matrix (tiny, VMEM-resident)
    w_rows = jnp.tile(w_eff, (b_tile, 1))                                     # (row_tile, K)
    sel = (jnp.arange(row_tile)[None, :] // C
           == jnp.arange(b_tile)[:, None]).astype(f32)                        # (b_tile, row_tile)

    n_rt = B_pad // b_tile
    n_hw = HW_pad // hw_tile

    kernel = partial(_attn_weights_kernel, eps=float(eps),
                     inv_hw=1.0 / hw, inv_hw_m1=1.0 / max(hw - 1, 1))

    out = pl.pallas_call(
        kernel,
        out_shape=jax.ShapeDtypeStruct((B_pad, K), f32),
        grid_spec=pltpu.PrefetchScalarGridSpec(
            num_scalar_prefetch=0,
            grid=(n_rt, n_hw),
            in_specs=[
                pl.BlockSpec((row_tile, hw_tile), lambda i, j: (i, j)),   # x (streamed)
                pl.BlockSpec((row_tile, K), lambda i, j: (0, 0)),         # w_rows
                pl.BlockSpec((b_tile, row_tile), lambda i, j: (0, 0)),    # sel
                pl.BlockSpec((1, K), lambda i, j: (0, 0)),                # b_eff
            ],
            out_specs=pl.BlockSpec((b_tile, K), lambda i, j: (i, 0)),
            scratch_shapes=[pltpu.VMEM((row_tile, 1), f32),               # sum
                            pltpu.VMEM((row_tile, 1), f32)],              # sum of squares
        ),
        compiler_params=pltpu.CompilerParams(
            dimension_semantics=("parallel", "arbitrary"),
            vmem_limit_bytes=32 * 1024 * 1024,
        ),
    )(xf, w_rows, sel, b_eff)

    return out[:B]


def attn_weights_reference(x, w_t, gamma, beta, run_mean, run_var,
                           *, eps=1e-3, bn_eps=1e-5):
    B, C, H, W = x.shape
    xf = x.reshape(B, C, H * W).astype(jnp.float32)
    mean = jnp.mean(xf, axis=-1)
    var = jnp.var(xf, axis=-1, ddof=1)
    y = mean * jax.lax.rsqrt(var + eps)
    z = y @ w_t.astype(jnp.float32)
    zn = (z - run_mean) * jax.lax.rsqrt(run_var + bn_eps) * gamma + beta
    return jnp.clip(zn + 3.0, 0.0, 6.0) / 6.0


# TODO(synk): attn_mode=1 (GroupNorm) and use_maxpool / use_rsd=False branches
# are non-default configs of the module and are not implemented here.

if __name__ == "__main__":
    # num_features=C, num_affine_trans=K
    B, C, H, W = 2, 4, 16, 16
    K = 8

    key = jax.random.PRNGKey(0)
    kx, kw = jax.random.split(key)

    x = jax.random.normal(kx, (B, C, H, W), dtype=jnp.float32)

    # Conv2d(C, K, 1, bias=False) weight, kaiming-normal style init; stored
    # transposed as (C, K) for the kernel.
    w = jax.random.normal(kw, (K, C), dtype=jnp.float32) * jnp.sqrt(2.0 / C)
    w_t = w.T  # (C, K)

    # BatchNorm2d params (constant_init(m, 1)): gamma=1, beta=0; fresh running
    # stats mean=0, var=1 (eval mode).
    gamma = jnp.ones((K,), dtype=jnp.float32)
    beta = jnp.zeros((K,), dtype=jnp.float32)
    run_mean = jnp.zeros((K,), dtype=jnp.float32)
    run_var = jnp.ones((K,), dtype=jnp.float32)

    # hw_tile=128 so the demo exercises the multi-step HW reduction pipeline.
    out = attn_weights_forward(x, w_t, gamma, beta, run_mean, run_var,
                               hw_tile=128)
    out = jax.block_until_ready(out)

    ref = attn_weights_reference(x, w_t, gamma, beta, run_mean, run_var)
    assert out.shape == (B, K)
    assert jnp.allclose(out, ref, atol=1e-4, rtol=1e-4), (out, ref)

    print("KERNEL_OK")
</pallas_src>

<mosaic_0001>
module attributes {stable_mosaic.version = 11 : i64} {
  func.func @_attn_weights_kernel(%arg0: i32, %arg1: i32, %arg2: memref<8x128xf32, #tpu.memory_space<vmem>>, %arg3: memref<8x8xf32, #tpu.memory_space<vmem>>, %arg4: memref<2x8xf32, #tpu.memory_space<vmem>>, %arg5: memref<1x8xf32, #tpu.memory_space<vmem>>, %arg6: memref<2x8xf32, #tpu.memory_space<vmem>>, %arg7: memref<8x1xf32, #tpu.memory_space<vmem>>, %arg8: memref<8x1xf32, #tpu.memory_space<vmem>>) attributes {dimension_semantics = [#tpu.dimension_semantics<parallel>, #tpu.dimension_semantics<arbitrary>], iteration_bounds = array<i64: 1, 2>, scalar_prefetch = 0 : i64, scratch_operands = 2 : i64, tpu.core_type = #tpu.core_type<tc>, window_params = [{transform_indices = @transform_0, window_bounds = array<i64: 8, 128>}, {pipeline_mode = #tpu.pipeline_mode<synchronous>, transform_indices = @transform_1, window_bounds = array<i64: 8, 8>}, {pipeline_mode = #tpu.pipeline_mode<synchronous>, transform_indices = @transform_2, window_bounds = array<i64: 2, 8>}, {pipeline_mode = #tpu.pipeline_mode<synchronous>, transform_indices = @transform_3, window_bounds = array<i64: 1, 8>}, {transform_indices = @transform_4, window_bounds = array<i64: 2, 8>}]} {
    %c0_i32 = arith.constant 0 : i32
    %0 = arith.cmpi eq, %arg1, %c0_i32 : i32
    %1 = arith.extui %0 : i1 to i32
    %c0_i32_0 = arith.constant 0 : i32
    %2 = arith.cmpi ne, %1, %c0_i32_0 : i32
    scf.if %2 {
      %cst_12 = arith.constant 0.000000e+00 : f32
      %18 = vector.broadcast %cst_12 : f32 to vector<8x1xf32>
      %c0_13 = arith.constant 0 : index
      %c0_14 = arith.constant 0 : index
      %19 = vector.load %arg7[%c0_13, %c0_14] : memref<8x1xf32, #tpu.memory_space<vmem>>, vector<8x1xf32>
      tpu.vector_store %arg7[%c0_13, %c0_14], %18 {strides = array<i32>} : memref<8x1xf32, #tpu.memory_space<vmem>>, vector<8x1xf32>,
      %cst_15 = arith.constant 0.000000e+00 : f32
      %20 = vector.broadcast %cst_15 : f32 to vector<8x1xf32>
      %c0_16 = arith.constant 0 : index
      %c0_17 = arith.constant 0 : index
      %21 = vector.load %arg8[%c0_16, %c0_17] : memref<8x1xf32, #tpu.memory_space<vmem>>, vector<8x1xf32>
      tpu.vector_store %arg8[%c0_16, %c0_17], %20 {strides = array<i32>} : memref<8x1xf32, #tpu.memory_space<vmem>>, vector<8x1xf32>,
    } else {
    }
    %c0 = arith.constant 0 : index
    %c0_1 = arith.constant 0 : index
    %3 = vector.load %arg2[%c0, %c0_1] : memref<8x128xf32, #tpu.memory_space<vmem>>, vector<8x128xf32>
    %c0_2 = arith.constant 0 : index
    %c0_3 = arith.constant 0 : index
    %4 = vector.load %arg7[%c0_2, %c0_3] : memref<8x1xf32, #tpu.memory_space<vmem>>, vector<8x1xf32>
    %cst = arith.constant dense<0.000000e+00> : vector<8xf32>
    %5 = vector.multi_reduction <add>, %3, %cst [1] : vector<8x128xf32> to vector<8xf32>
    %6 = vector.shape_cast %5 : vector<8xf32> to vector<8x1xf32>
    %7 = arith.addf %4, %6 : vector<8x1xf32>
    %c0_4 = arith.constant 0 : index
    %c0_5 = arith.constant 0 : index
    %8 = vector.load %arg7[%c0_4, %c0_5] : memref<8x1xf32, #tpu.memory_space<vmem>>, vector<8x1xf32>
    tpu.vector_store %arg7[%c0_4, %c0_5], %7 {strides = array<i32>} : memref<8x1xf32, #tpu.memory_space<vmem>>, vector<8x1xf32>,
    %c0_6 = arith.constant 0 : index
    %c0_7 = arith.constant 0 : index
    %9 = vector.load %arg8[%c0_6, %c0_7] : memref<8x1xf32, #tpu.memory_space<vmem>>, vector<8x1xf32>
    %10 = arith.mulf %3, %3 : vector<8x128xf32>
    %cst_8 = arith.constant dense<0.000000e+00> : vector<8xf32>
    %11 = vector.multi_reduction <add>, %10, %cst_8 [1] : vector<8x128xf32> to vector<8xf32>
    %12 = vector.shape_cast %11 : vector<8xf32> to vector<8x1xf32>
    %13 = arith.addf %9, %12 : vector<8x1xf32>
    %c0_9 = arith.constant 0 : index
    %c0_10 = arith.constant 0 : index
    %14 = vector.load %arg8[%c0_9, %c0_10] : memref<8x1xf32, #tpu.memory_space<vmem>>, vector<8x1xf32>
    tpu.vector_store %arg8[%c0_9, %c0_10], %13 {strides = array<i32>} : memref<8x1xf32, #tpu.memory_space<vmem>>, vector<8x1xf32>,
    %c1_i32 = arith.constant 1 : i32
    %15 = arith.cmpi eq, %arg1, %c1_i32 : i32
    %16 = arith.extui %15 : i1 to i32
    %c0_i32_11 = arith.constant 0 : i32
    %17 = arith.cmpi ne, %16, %c0_i32_11 : i32
    scf.if %17 {
      %c0_12 = arith.constant 0 : index
      %c0_13 = arith.constant 0 : index
      %18 = vector.load %arg7[%c0_12, %c0_13] : memref<8x1xf32, #tpu.memory_space<vmem>>, vector<8x1xf32>
      %cst_14 = arith.constant 3.906250e-03 : f32
      %19 = vector.broadcast %cst_14 : f32 to vector<8x1xf32>
      %20 = arith.mulf %18, %19 : vector<8x1xf32>
      %c0_15 = arith.constant 0 : index
      %c0_16 = arith.constant 0 : index
      %21 = vector.load %arg8[%c0_15, %c0_16] : memref<8x1xf32, #tpu.memory_space<vmem>>, vector<8x1xf32>
      %22 = arith.mulf %18, %20 : vector<8x1xf32>
      %23 = arith.subf %21, %22 : vector<8x1xf32>
      %cst_17 = arith.constant 0.000000e+00 : f32
      %24 = vector.broadcast %cst_17 : f32 to vector<8x1xf32>
      %25 = arith.maximumf %23, %24 : vector<8x1xf32>
      %cst_18 = arith.constant 0.00392156886 : f32
      %26 = vector.broadcast %cst_18 : f32 to vector<8x1xf32>
      %27 = arith.mulf %25, %26 : vector<8x1xf32>
      %cst_19 = arith.constant 1.000000e-03 : f32
      %28 = vector.broadcast %cst_19 : f32 to vector<8x1xf32>
      %29 = arith.addf %27, %28 : vector<8x1xf32>
      %30 = math.rsqrt %29 : vector<8x1xf32>
      %31 = arith.mulf %20, %30 : vector<8x1xf32>
      %c0_20 = arith.constant 0 : index
      %c0_21 = arith.constant 0 : index
      %32 = vector.load %arg3[%c0_20, %c0_21] : memref<8x8xf32, #tpu.memory_space<vmem>>, vector<8x8xf32>
      %33 = vector.broadcast %31 : vector<8x1xf32> to vector<8x8xf32>
      %34 = arith.mulf %33, %32 : vector<8x8xf32>
      %c0_22 = arith.constant 0 : index
      %c0_23 = arith.constant 0 : index
      %35 = vector.load %arg4[%c0_22, %c0_23] : memref<2x8xf32, #tpu.memory_space<vmem>>, vector<2x8xf32>
      %cst_24 = arith.constant dense<0.000000e+00> : vector<2x8xf32>
      %36 = tpu.matmul %35, %34, %cst_24 {dimension_numbers = #tpu.dot_dimension_numbers<[1], [0], [0], [1], [0, 0, 1, 1], [], []>} : vector<2x8xf32>, vector<8x8xf32>, vector<2x8xf32> -> vector<2x8xf32>
      %c0_25 = arith.constant 0 : index
      %c0_26 = arith.constant 0 : index
      %37 = vector.load %arg5[%c0_25, %c0_26] : memref<1x8xf32, #tpu.memory_space<vmem>>, vector<1x8xf32>
      %38 = vector.broadcast %37 : vector<1x8xf32> to vector<2x8xf32>
      %39 = arith.addf %36, %38 : vector<2x8xf32>
      %cst_27 = arith.constant 3.000000e+00 : f32
      %40 = vector.broadcast %cst_27 : f32 to vector<2x8xf32>
      %41 = arith.addf %39, %40 : vector<2x8xf32>
      %cst_28 = arith.constant 0.000000e+00 : f32
      %cst_29 = arith.constant 6.000000e+00 : f32
      %42 = vector.broadcast %cst_28 : f32 to vector<2x8xf32>
      %43 = arith.maximumf %42, %41 : vector<2x8xf32>
      %44 = vector.broadcast %cst_29 : f32 to vector<2x8xf32>
      %45 = arith.minimumf %44, %43 : vector<2x8xf32>
      %cst_30 = arith.constant 0.166666672 : f32
      %46 = vector.broadcast %cst_30 : f32 to vector<2x8xf32>
      %47 = arith.mulf %45, %46 : vector<2x8xf32>
      %c0_31 = arith.constant 0 : index
      %c0_32 = arith.constant 0 : index
      %48 = vector.load %arg6[%c0_31, %c0_32] : memref<2x8xf32, #tpu.memory_space<vmem>>, vector<2x8xf32>
      tpu.vector_store %arg6[%c0_31, %c0_32], %47 {strides = array<i32>} : memref<2x8xf32, #tpu.memory_space<vmem>>, vector<2x8xf32>,
    } else {
    }
    return
  }
  func.func @transform_0(%arg0: i32, %arg1: i32) -> (i32, i32) {
    %c0_i32 = arith.constant 0 : i32
    return %arg0, %arg1 : i32, i32
  }
  func.func @transform_1(%arg0: i32, %arg1: i32) -> (i32, i32) {
    %c0_i32 = arith.constant 0 : i32
    %c0_i32_0 = arith.constant 0 : i32
    %c0_i32_1 = arith.constant 0 : i32
    return %c0_i32, %c0_i32_0 : i32, i32
  }
  func.func @transform_2(%arg0: i32, %arg1: i32) -> (i32, i32) {
    %c0_i32 = arith.constant 0 : i32
    %c0_i32_0 = arith.constant 0 : i32
    %c0_i32_1 = arith.constant 0 : i32
    return %c0_i32, %c0_i32_0 : i32, i32
  }
  func.func @transform_3(%arg0: i32, %arg1: i32) -> (i32, i32) {
    %c0_i32 = arith.constant 0 : i32
    %c0_i32_0 = arith.constant 0 : i32
    %c0_i32_1 = arith.constant 0 : i32
    return %c0_i32, %c0_i32_0 : i32, i32
  }
  func.func @transform_4(%arg0: i32, %arg1: i32) -> (i32, i32) {
    %c0_i32 = arith.constant 0 : i32
    %c0_i32_0 = arith.constant 0 : i32
    return %arg0, %c0_i32 : i32, i32
  }
}

</mosaic_0001>

<llo_original>
// kernel: tpu_custom_call.1
$region0: #{tpu_custom_call.1}
  #allocation0 [shape = 'u32[]', space=smem, size = 0x4, offset = 0x4, fixed_abs, tag = 'smem constant byte address 0x4 - core index']
  #allocation1 [shape = 'u32[144,128]{1,0:T(1,128)}', space=vmem, size = 0x12000, scoped, tag = 'internal scratch']
  #allocation2 [shape = 'f32[8,1]{1,0:T(8,128)}', space=vmem, size = 0x1000, scoped, tag = 'scratch operand']
  #allocation3 [shape = 'f32[8,1]{1,0:T(8,128)}', space=vmem, size = 0x1000, scoped, tag = 'scratch operand']
  %s0 = inlined_call_operand.hbm [shape: f32[8,256], index: 0, kind: input, shape index: {}]
  %s1 = inlined_call_operand.hbm [shape: f32[8,8], index: 1, kind: input, shape index: {}]
  %s2 = inlined_call_operand.vmem [shape: f32[2,8], index: 2, kind: input, shape index: {}]
  %s3 = inlined_call_operand.vmem [shape: f32[1,8], index: 3, kind: input, shape index: {}]
  %s4 = inlined_call_operand.hbm [shape: f32[2,8], index: 4, kind: output, shape index: {}]
  %s5 = sld [smem:[#allocation0]]
  $region65: #{tpu_custom_call.1} parent=0
    _
  %s7 = ssub.s32 1, %s5
  %s8 = scalar_select 0, %s7, %s5
  $region1: #{tpu_custom_call.1} parent=0
    #allocation4 [shape = 'u8[8192]{0}', space=vmem, size = 0x2000, scoped, tag = 'input window, operand 0']
    #allocation5 [shape = 's32[2]{0}', space=sflag, size = 0x8, scoped, tag = 'scoped memory for tpu_custom_call.1']
    #allocation6 [shape = 's32[2]{0}', space=sflag, size = 0x8, scoped, tag = 'scoped memory for tpu_custom_call.1']
    #allocation7 [shape = 'u8[4096]{0}', space=vmem, size = 0x1000, scoped, tag = 'input window, operand 1, single buffered']
    #allocation8 [shape = 's32[1]{0}', space=sflag, size = 0x4, scoped, tag = 'scoped memory for tpu_custom_call.1']
    #allocation9 [shape = 'u8[1024]{0}', space=vmem, size = 0x400, scoped, tag = 'output window, operand 0, single buffered']
    %9 = vsyncpa [#allocation5], 0
    %s10 = scalar_lea.sflag [#allocation5], 1
    %11 = vsyncpa %s10, 0
    %12 = vsyncpa [#allocation8], 0
    %13 = vsyncpa [#allocation6], 0
    loop: start=0, step=1, limit=4
    $region2: #{tpu_custom_call.1} parent=1 // loop_pre_header
      _
    $region3: #{tpu_custom_call.1} parent=1 // loop_header
      %s15 = sphi 0, %s19
      %p16 = scmp.ge.s32.totalorder %s15, 4
      %s22 = sphi 0, %s34
      %s23 = sphi 0, %s30
      %s24 = sphi 0, %s22
      %s25 = sphi 0, %s23
      %s26 = sphi 0, %s24
      %s27 = sphi 0, %s25
      %s39 = sphi 0, %s41
      %s42 = sphi 0, %s39
      %s43 = sphi 0, %s42
      %s59 = sphi 0, %s43
      %s63 = sphi 0, %s63
      %s65 = sphi 0, %s63
      %s66 = sphi 0, %s65
      %s80 = sphi 0, %s66
      %s84 = sphi 0, %s84
      %s86 = sphi 0, %s84
      %s87 = sphi 0, %s86
      %s101 = sphi 0, %s87
      %s105 = sphi 0, %s105
      %s107 = sphi 0, %s105
      %s108 = sphi 0, %s107
      %s122 = sphi 0, %s108
      %s128 = sphi 0, %s130
      %s131 = sphi 0, %s128
      %s132 = sphi 0, %s131
      %s148 = sphi 0, %s132
    $region4: #{tpu_custom_call.1} parent=1 // loop_header_branch
      %18 = sbr.rel (%p16) target = $region8
    $region5: #{tpu_custom_call.1} parent=1 // loop_body
      %s20 = ssub.s32 %s15, 1
      %s21 = ssub.s32 %s15, 2
      %s28 = sadd.s32 1, %s23
      %p29 = scmp.ge.s32.totalorder %s28, 2
      %s30 = scalar_select %p29, 0, %s28
      %s31 = sadd.s32 1, %s22
      %s32 = scalar_select %p29, %s31, %s22
      %p33 = scmp.ge.s32.totalorder %s32, 1
      %s34 = scalar_select %p33, 0, %s32
      %s35 = ssub.s32 %s22, %s34
      %s36 = ssub.s32 %s23, %s30
      %s37 = sor.u32 %s35, %s36
      %p38 = scmp.eq.s32.totalorder %s37, 0
      %s40 = sadd.s32 %s39, 1
      %s41 = scalar_select %p38, %s39, %s40
      %p44 = pneg %p38
      %p45 = scmp.eq.s32.totalorder %s15, 1
      %p46 = por %p44, %p45
      %p47 = scmp.ne.s32.totalorder %s39, %s42
      %p48 = scmp.eq.s32.totalorder %s15, 0
      %p49 = por %p47, %p48
      %p50 = scmp.ne.s32.totalorder %s39, %s42
      %p51 = scmp.eq.s32.totalorder %s20, 1
      %p52 = por %p50, %p51
      %p53 = scmp.ne.s32.totalorder %s42, %s43
      %p54 = scmp.eq.s32.totalorder %s20, 0
      %p55 = por %p53, %p54
      %p56 = scmp.ne.s32.totalorder %s42, %s43
      %p57 = scmp.eq.s32.totalorder %s21, 1
      %p58 = por %p56, %p57
      %p60 = scmp.ne.s32.totalorder %s43, %s59
      %p61 = scmp.eq.s32.totalorder %s21, 0
      %p62 = por %p60, %p61
      %s64 = sadd.s32 %s63, 1
      %p67 = scmp.eq.s32.totalorder %s15, 1
      %p68 = scmp.ne.s32.totalorder %s63, %s65
      %p69 = scmp.eq.s32.totalorder %s15, 0
      %p70 = por %p68, %p69
      %p71 = scmp.ne.s32.totalorder %s63, %s65
      %p72 = scmp.eq.s32.totalorder %s20, 1
      %p73 = por %p71, %p72
      %p74 = scmp.ne.s32.totalorder %s65, %s66
      %p75 = scmp.eq.s32.totalorder %s20, 0
      %p76 = por %p74, %p75
      %p77 = scmp.ne.s32.totalorder %s65, %s66
      %p78 = scmp.eq.s32.totalorder %s21, 1
      %p79 = por %p77, %p78
      %p81 = scmp.ne.s32.totalorder %s66, %s80
      %p82 = scmp.eq.s32.totalorder %s21, 0
      %p83 = por %p81, %p82
      %s85 = sadd.s32 %s84, 1
      %p88 = scmp.eq.s32.totalorder %s15, 1
      %p89 = scmp.ne.s32.totalorder %s84, %s86
      %p90 = scmp.eq.s32.totalorder %s15, 0
      %p91 = por %p89, %p90
      %p92 = scmp.ne.s32.totalorder %s84, %s86
      %p93 = scmp.eq.s32.totalorder %s20, 1
      %p94 = por %p92, %p93
      %p95 = scmp.ne.s32.totalorder %s86, %s87
      %p96 = scmp.eq.s32.totalorder %s20, 0
      %p97 = por %p95, %p96
      %p98 = scmp.ne.s32.totalorder %s86, %s87
      %p99 = scmp.eq.s32.totalorder %s21, 1
      %p100 = por %p98, %p99
      %p102 = scmp.ne.s32.totalorder %s87, %s101
      %p103 = scmp.eq.s32.totalorder %s21, 0
      %p104 = por %p102, %p103
      %s106 = sadd.s32 %s105, 1
      %p109 = scmp.eq.s32.totalorder %s15, 1
      %p110 = scmp.ne.s32.totalorder %s105, %s107
      %p111 = scmp.eq.s32.totalorder %s15, 0
      %p112 = por %p110, %p111
      %p113 = scmp.ne.s32.totalorder %s105, %s107
      %p114 = scmp.eq.s32.totalorder %s20, 1
      %p115 = por %p113, %p114
      %p116 = scmp.ne.s32.totalorder %s107, %s108
      %p117 = scmp.eq.s32.totalorder %s20, 0
      %p118 = por %p116, %p117
      %p119 = scmp.ne.s32.totalorder %s107, %s108
      %p120 = scmp.eq.s32.totalorder %s21, 1
      %p121 = por %p119, %p120
      %p123 = scmp.ne.s32.totalorder %s108, %s122
      %p124 = scmp.eq.s32.totalorder %s21, 0
      %p125 = por %p123, %p124
      %s126 = ssub.s32 %s22, %s34
      %p127 = scmp.eq.s32.totalorder %s126, 0
      %s129 = sadd.s32 %s128, 1
      %s130 = scalar_select %p127, %s128, %s129
      %p133 = pneg %p127
      %p134 = scmp.eq.s32.totalorder %s15, 1
      %p135 = por %p133, %p134
      %p136 = scmp.ne.s32.totalorder %s128, %s131
      %p137 = scmp.eq.s32.totalorder %s15, 0
      %p138 = por %p136, %p137
      %p139 = scmp.ne.s32.totalorder %s128, %s131
      %p140 = scmp.eq.s32.totalorder %s20, 1
      %p141 = por %p139, %p140
      %p142 = scmp.ne.s32.totalorder %s131, %s132
      %p143 = scmp.eq.s32.totalorder %s20, 0
      %p144 = por %p142, %p143
      %p145 = scmp.ne.s32.totalorder %s131, %s132
      %p146 = scmp.eq.s32.totalorder %s21, 1
      %p147 = por %p145, %p146
      %p149 = scmp.ne.s32.totalorder %s132, %s148
      %p150 = scmp.eq.s32.totalorder %s21, 0
      %p151 = por %p149, %p150
      %p152 = scmp.le.s32.totalorder 1, %s15
      %p153 = scmp.lt.s32.totalorder %s15, 3
      %p154 = pnand %p152, %p153
      %p155 = pneg %p154
      // Predicated region
      $region9: #{tpu_custom_call.1} parent=5 // pred_check
        _
      $region10: #{tpu_custom_call.1} parent=5 // pred_check_branch
        %157 = sbr.rel (%p154) target = $region12
      $region11: #{tpu_custom_call.1} parent=5 // pred_region
        %s158 = ssub.s32 %s15, 1
        // Predicated region
        $region13: #{tpu_custom_call.1} parent=11 // pred_check
          %p159 = pneg %p76
        $region14: #{tpu_custom_call.1} parent=11 // pred_check_branch
          %161 = sbr.rel (%p159) target = $region16
        $region15: #{tpu_custom_call.1} parent=11 // pred_region
          %s163 = ssub.s32 128, 128
          %164 = vsyncadd [#allocation8], %s163
          %s166 = sshll.u32 [#allocation7], 4
          %s167 = int_to_ptr.vmem [resolvable:$true] %s166
          %169 = dma.hbm_to_vmem [thread:$0]  %s1, 128, %s167, [#allocation8]
        $region16: #{tpu_custom_call.1} parent=11 // pred_fallthru
          _
        // Predicated region
        $region17: #{tpu_custom_call.1} parent=11 // pred_check
          %p170 = pneg %p97
        $region18: #{tpu_custom_call.1} parent=11 // pred_check_branch
          %172 = sbr.rel (%p170) target = $region20
        $region19: #{tpu_custom_call.1} parent=11 // pred_region
          _
        $region20: #{tpu_custom_call.1} parent=11 // pred_fallthru
          _
        // Predicated region
        $region21: #{tpu_custom_call.1} parent=11 // pred_check
          %p173 = pneg %p118
        $region22: #{tpu_custom_call.1} parent=11 // pred_check_branch
          %175 = sbr.rel (%p173) target = $region24
        $region23: #{tpu_custom_call.1} parent=11 // pred_region
          _
        $region24: #{tpu_custom_call.1} parent=11 // pred_fallthru
          _
      $region12: #{tpu_custom_call.1} parent=5 // pred_fallthru
        _
      %p176 = scmp.lt.s32.totalorder %s15, 2
      // Predicated region
      $region25: #{tpu_custom_call.1} parent=5 // pred_check
        %p177 = pneg %p176
      $region26: #{tpu_custom_call.1} parent=5 // pred_check_branch
        %179 = sbr.rel (%p177) target = $region28
      $region27: #{tpu_custom_call.1} parent=5 // pred_region
        // Predicated region
        $region29: #{tpu_custom_call.1} parent=27 // pred_check
          %p180 = pneg %p49
        $region30: #{tpu_custom_call.1} parent=27 // pred_check_branch
          %182 = sbr.rel (%p180) target = $region32
        $region31: #{tpu_custom_call.1} parent=27 // pred_region
          %s183 = sand.u32 %s39, 1
          %s184 = scalar_lea.sflag [#allocation5], %s183
          %s185 = sand.u32 %s39, 1
          %s186 = smul.addr %s185, 8
          %s187 = scalar_lea.vmem [#allocation4], %s186
          %s189 = ssub.s32 128, 128
          %190 = vsyncadd %s184, %s189
          %s191 = smul.addr %s22, 2
          %s192 = sadd.s32 %s23, %s191
          %s193 = smul.addr %s192, 128
          %s194 = scalar_lea.hbm %s0, %s193
          %s196 = sshll.u32 %s187, 4
          %s197 = int_to_ptr.vmem [resolvable:$true] %s196
          %199 = dma.hbm_to_vmem [thread:$0]  %s194, 128, %s197, %s184
        $region32: #{tpu_custom_call.1} parent=27 // pred_fallthru
          _
      $region28: #{tpu_custom_call.1} parent=5 // pred_fallthru
        _
      %p200 = scmp.le.s32.totalorder 1, %s15
      %p201 = scmp.lt.s32.totalorder %s15, 3
      %p202 = pnand %p200, %p201
      %p203 = pneg %p202
      // Predicated region
      $region33: #{tpu_custom_call.1} parent=5 // pred_check
        _
      $region34: #{tpu_custom_call.1} parent=5 // pred_check_branch
        %205 = sbr.rel (%p202) target = $region36
      $region35: #{tpu_custom_call.1} parent=5 // pred_region
        %s206 = ssub.s32 %s15, 1
        %s207 = sand.u32 %s42, 1
        %s208 = scalar_lea.sflag [#allocation5], %s207
        %s209 = sand.u32 %s42, 1
        %s210 = smul.addr %s209, 8
        %s211 = scalar_lea.vmem [#allocation4], %s210
        // Predicated region
        $region37: #{tpu_custom_call.1} parent=35 // pred_check
          %p212 = pneg %p55
        $region38: #{tpu_custom_call.1} parent=35 // pred_check_branch
          %214 = sbr.rel (%p212) target = $region40
        $region39: #{tpu_custom_call.1} parent=35 // pred_region
          %215 = dma.done %s208, 128
        $region40: #{tpu_custom_call.1} parent=35 // pred_fallthru
          _
        // Predicated region
        $region41: #{tpu_custom_call.1} parent=35 // pred_check
          %p216 = pneg %p76
        $region42: #{tpu_custom_call.1} parent=35 // pred_check_branch
          %218 = sbr.rel (%p216) target = $region44
        $region43: #{tpu_custom_call.1} parent=35 // pred_region
          %219 = dma.done [#allocation8], 128
        $region44: #{tpu_custom_call.1} parent=35 // pred_fallthru
          _
        %s220 = sand.u32 %s42, 1
        %s221 = scalar_lea.sflag [#allocation5], %s220
        %s222 = sand.u32 %s42, 1
        %s223 = smul.addr %s222, 8
        %s224 = scalar_lea.vmem [#allocation4], %s223
        %p225 = pneg %p55
        %p226 = pneg %p52
        %p227 = pneg %p76
        %p228 = pneg %p73
        %p229 = pneg %p97
        %p230 = pneg %p94
        %p231 = pneg %p118
        %p232 = pneg %p115
        %p233 = pneg %p144
        %p234 = pneg %p141
        %p235 = scmp.eq.s32.totalorder %s25, 0
        // Predicated region
        $region45: #{tpu_custom_call.1} parent=35 // pred_check
          %p236 = pneg %p235
        $region46: #{tpu_custom_call.1} parent=35 // pred_check_branch
          %238 = sbr.rel (%p236) target = $region48
        $region47: #{tpu_custom_call.1} parent=35 // pred_region
          %vm239 = vcmask 7168
          %240 = vst.msk [vmem:[#allocation2] sm:$0xff] %vm239, 0.0
          %241 = vst.msk [vmem:[#allocation3] sm:$0xff] %vm239, 0.0
        $region48: #{tpu_custom_call.1} parent=35 // pred_fallthru
          _
        %v242 = vld [vmem:[%s211] sm:$0xff]
        %v243 = vld [vmem:[#allocation2] sm:$0xff]
        %244 = vadd.xlane.f32.xlu0 %v242
        %v245 = vpop.xlane.xlu0 %244
        %v246 = vadd.f32 %v243, %v245
        %vm247 = vcmask 7168
        %248 = vst.msk [vmem:[#allocation2] sm:$0xff] %vm247, %v246
        %v249 = vld [vmem:[#allocation3] sm:$0xff]
        %v250 = vmul.f32 %v242, %v242
        %251 = vadd.xlane.f32.xlu0 %v250
        %v252 = vpop.xlane.xlu0 %251
        %v253 = vadd.f32 %v249, %v252
        %254 = vst.msk [vmem:[#allocation3] sm:$0xff] %vm247, %v253
        %p255 = scmp.eq.s32.totalorder %s25, 1
        // Predicated region
        $region49: #{tpu_custom_call.1} parent=35 // pred_check
          %p256 = pneg %p255
        $region50: #{tpu_custom_call.1} parent=35 // pred_check_branch
          %258 = sbr.rel (%p256) target = $region52
        $region51: #{tpu_custom_call.1} parent=35 // pred_region
          %v259 = vld [vmem:[#allocation2] sm:$0xff]
          %v260 = vmul.f32 %v259, 0.00390625
          %v261 = vld [vmem:[#allocation3] sm:$0xff]
          %v262 = vmul.f32 %v259, %v260
          %v263 = vsub.f32 %v261, %v262
          %v264 = vmax.f32 %v263, 0.0
          %v265 = vmul.f32 %v264, 0.003921569
          %v266 = vadd.f32 %v265, 0.001
          %v267 = vrsqrt.pop %v266
          %v268 = vmul.f32 %v260, %v267
          %v269 = vld [vmem:[#allocation7] sm:$0xff]
          %271 = vset.pattern.permute.xlu0 0
          %272 = vperm.xlu0 %271, %v268
          %v273 = vpop.permute.xlu0 %272
          %v275 = vmul.f32 %v273, %v269
          %v276 = vld [vmem:[%s2] sm:$0x3]
          %v277 = vld [vmem:[%s3] sm:$0x1]
          %v279 = vlaneseq
          %v280 = vshrl.u32 %v279, 7
          %v281 = vsub.s32 0, %v280
          %v282 = vrot.slane %v277, %v281
          %vm284 = vcmask 64512
          %v286 = vsel %vm284, %v276, 0
          %288 = vmatprep.subr.mxu0 0.0
          %289 = vmatpush1.msra.mxu0 %v275
          %290 = vmatprep.subr.mxu0 0.0
          %291 = vmatpush1.msra.mxu0 0.0
          %292 = vmatprep.subr.mxu0 0.0
          %293 = vmatpush1.msra.mxu0 0.0
          %294 = vmatprep.subr.mxu0 0.0
          %295 = vmatpush1.msra.mxu0 0.0
          %296 = vmatprep.subr.mxu0 0.0
          %297 = vmatpush1.msra.mxu0 0.0
          %298 = vmatprep.subr.mxu0 0.0
          %299 = vmatpush1.msra.mxu0 0.0
          %300 = vmatprep.subr.mxu0 0.0
          %301 = vmatpush1.msra.mxu0 0.0
          %302 = vmatprep.subr.mxu0 0.0
          %303 = vmatpush1.msra.mxu0 0.0
          %304 = vmatprep.subr.mxu0 0.0
          %305 = vmatpush1.msra.mxu0 0.0
          %306 = vmatprep.subr.mxu0 0.0
          %307 = vmatpush1.msra.mxu0 0.0
          %308 = vmatprep.subr.mxu0 0.0
          %309 = vmatpush1.msra.mxu0 0.0
          %310 = vmatprep.subr.mxu0 0.0
          %311 = vmatpush1.msra.mxu0 0.0
          %312 = vmatprep.subr.mxu0 0.0
          %313 = vmatpush1.msra.mxu0 0.0
          %314 = vmatprep.subr.mxu0 0.0
          %315 = vmatpush1.msra.mxu0 0.0
          %316 = vmatprep.subr.mxu0 0.0
          %317 = vmatpush1.msra.mxu0 0.0
          %318 = vmatprep.subr.mxu0 0.0
          %319 = vmatpush1.msra.mxu0 0.0
          %320 = vmatprep.subr.mxu0 0.0
          %321 = vmatpush1.msra.mxu0 0.0
          %322 = vmatprep.subr.mxu0 0.0
          %323 = vmatpush1.msra.mxu0 0.0
          %324 = vmatprep.subr.mxu0 0.0
          %325 = vmatpush1.msra.mxu0 0.0
          %326 = vmatprep.subr.mxu0 0.0
          %327 = vmatpush1.msra.mxu0 0.0
          %328 = vmatprep.subr.mxu0 0.0
          %329 = vmatpush1.msra.mxu0 0.0
          %330 = vmatprep.subr.mxu0 0.0
          %331 = vmatpush1.msra.mxu0 0.0
          %332 = vmatprep.subr.mxu0 0.0
          %333 = vmatpush1.msra.mxu0 0.0
          %334 = vmatprep.subr.mxu0 0.0
          %335 = vmatpush1.msra.mxu0 0.0
          %336 = vmatprep.subr.mxu0 0.0
          %337 = vmatpush1.msra.mxu0 0.0
          %338 = vmatprep.subr.mxu0 0.0
          %339 = vmatpush1.msra.mxu0 0.0
          %340 = vmatprep.subr.mxu0 0.0
          %341 = vmatpush1.msra.mxu0 0.0
          %342 = vmatprep.subr.mxu0 0.0
          %343 = vmatpush1.msra.mxu0 0.0
          %344 = vmatprep.subr.mxu0 0.0
          %345 = vmatpush1.msra.mxu0 0.0
          %346 = vmatprep.subr.mxu0 0.0
          %347 = vmatpush1.msra.mxu0 0.0
          %348 = vmatprep.subr.mxu0 0.0
          %349 = vmatpush1.msra.mxu0 0.0
          %350 = vmatprep.subr.mxu0 0.0
          %351 = vmatpush1.msra.mxu0 0.0
          %352 = vmatprep.mubr.f32.mxu0 0.0
          %353 = vmatmul.mubr.f32.gmra.mrb[0].mxu0 %v286
          %v354 = vpop.f32.mrb[0].mxu0
          %v355 = vadd.f32 %v282, %v354
          %v356 = vpop.f32.mrb[0].mxu0
          %357 = vdwg.mxu0
          %v358 = vadd.f32 %v355, 3.0
          %v359 = vmax.f32 %v358, 0.0
          %v360 = vmin.f32 %v359, 6.0
          %v361 = vmul.f32 %v360, 0.16666667
          %vm362 = vcmask 58368
          %363 = vst.msk [vmem:[#allocation9] sm:$0x3] %vm362, %v361
        $region52: #{tpu_custom_call.1} parent=35 // pred_fallthru
          _
        // Predicated region
        $region53: #{tpu_custom_call.1} parent=35 // pred_check
          %p364 = pneg %p141
        $region54: #{tpu_custom_call.1} parent=35 // pred_check_branch
          %366 = sbr.rel (%p364) target = $region56
        $region55: #{tpu_custom_call.1} parent=35 // pred_region
          %s368 = ssub.s32 32, 32
          %369 = vsyncadd [#allocation6], %s368
          %s370 = smul.addr %s24, 32
          %s371 = scalar_lea.hbm %s4, %s370
          %s373 = sshll.u32 [#allocation9], 4
          %s374 = int_to_ptr.vmem [resolvable:$true] %s373
          %376 = dma.vmem_to_hbm [thread:$0]  %s374, 32, %s371, [#allocation6]
        $region56: #{tpu_custom_call.1} parent=35 // pred_fallthru
          _
        // Predicated region
        $region57: #{tpu_custom_call.1} parent=35 // pred_check
          %p377 = pneg %p141
        $region58: #{tpu_custom_call.1} parent=35 // pred_check_branch
          %379 = sbr.rel (%p377) target = $region60
        $region59: #{tpu_custom_call.1} parent=35 // pred_region
          %380 = dma.done [#allocation6], 32
        $region60: #{tpu_custom_call.1} parent=35 // pred_fallthru
          _
      $region36: #{tpu_custom_call.1} parent=5 // pred_fallthru
        _
      %p381 = scmp.le.s32.totalorder 2, %s15
      // Predicated region
      $region61: #{tpu_custom_call.1} parent=5 // pred_check
        %p382 = pneg %p381
      $region62: #{tpu_custom_call.1} parent=5 // pred_check_branch
        %384 = sbr.rel (%p382) target = $region64
      $region63: #{tpu_custom_call.1} parent=5 // pred_region
        %s385 = ssub.s32 %s15, 2
      $region64: #{tpu_custom_call.1} parent=5 // pred_fallthru
        _
    $region6: #{tpu_custom_call.1} parent=1 // loop_footer
      %s19 = sadd.s32 1, %s15
    $region7: #{tpu_custom_call.1} parent=1 // loop_footer_branch
      %14 = sbr.rel target = $region3
    $region8: #{tpu_custom_call.1} parent=1 // loop_exit
      _
    %386 = vsyncpa [#allocation5], 1
    %s387 = scalar_lea.sflag [#allocation5], 1
    %388 = vsyncpa %s387, 1
    %389 = vsyncpa [#allocation8], 1
    %390 = vsyncpa [#allocation6], 1
    %s391 = scalar_lea.sflag [#allocation6], 1
    %392 = vsyncpa %s391, 1

</llo_original>
